<compile_context>
chip_gen: v7x
topology: tpu7x:2x2x1
jax: 0.10.0
libtpu: 0.0.40
codegen_flags: <defaults>
</compile_context>

<pallas_src>
import functools

import jax
import jax.numpy as jnp
from jax import lax
from jax.experimental import pallas as pl
from jax.experimental.pallas import tpu as pltpu


def _round_up(x, m):
    return (x + m - 1) // m * m


# Packed (lane-tile padded) widths / offsets.
_H1C = 256            # critic layer-1 lanes [0:200) live in [0:256)
_H1 = 384             # fused layer-1 output width (critic 256 + actor 128)
_H2 = 128             # fused layer-2 output width (critic h2 at 0:50, actor h2 at 64:114)
_H2A_OFF = 64         # actor h2 lane offset inside the 128-wide h2 slab
_OUT = 128            # packed output slab width
_VALUE_LANE = 64      # critic value lives at this lane of the output slab


def _actor_critic_kernel(x_ref, w1_ref, w2_ref, w3_ref, b_ref, out_ref,
                         *, action_bound):
    """One batch tile of the fused actor + critic MLP (3 bf16 MXU matmuls).

    Actor and critic weights are packed side-by-side (layer 1) / block-diagonally
    (layers 2 and 3); padded rows/cols are zero, so results match the unfused net.
    MXU operands are bf16, accumulation + bias + tanh are f32.
    """
    x = x_ref[...].astype(jnp.bfloat16)                               # [TB, S_pad]

    h1 = jnp.tanh(
        jnp.dot(x, w1_ref[...], preferred_element_type=jnp.float32)
        + b_ref[0:1, :])                                              # [TB, 384] f32
    h2 = jnp.tanh(
        jnp.dot(h1.astype(jnp.bfloat16), w2_ref[...],
                preferred_element_type=jnp.float32)
        + b_ref[1:2, :_H2])                                           # [TB, 128] f32
    pre = (jnp.dot(h2.astype(jnp.bfloat16), w3_ref[...],
                   preferred_element_type=jnp.float32)
           + b_ref[2:3, :_OUT])                                       # [TB, 128] f32

    # Actor lanes (< _VALUE_LANE): tanh(.) * action_bound.  Value lane: raw.
    lane = lax.broadcasted_iota(jnp.int32, pre.shape, 1)
    out_ref[...] = jnp.where(lane < _VALUE_LANE,
                             jnp.tanh(pre) * action_bound,
                             pre)


def actor_critic_forward(x, packed, action_bound, *, batch_tile=1024):
    """Fused actor-critic forward.

    x:      [B, state_dim] float32
    packed: dict from pack_params() (padded/packed bf16 weights + f32 bias slab + logstd)
    Returns (mu, std, value): ([B, A], [B, A], [B, 1]).
    """
    B, S = x.shape
    A = packed["logstd"].shape[-1]
    S_pad = packed["w1"].shape[0]

    x = x.astype(jnp.float32)
    if S_pad != S:
        # Tiny feature-dim pad only when state_dim is not already 8-aligned.
        x = jnp.pad(x, ((0, 0), (0, S_pad - S)))

    # Batch tile: up to `batch_tile` rows; small batches use a single 8-aligned tile.
    TB = batch_tile
    if B <= TB:
        TB = max(8, _round_up(B, 8))
    n_tiles = pl.cdiv(B, TB)   # ragged last tile is masked by Pallas

    # action_bound is a module constant (as in the PyTorch __init__); baking it in
    # statically is intentional.  Pass it via SMEM if it ever varies at runtime.
    kernel = functools.partial(_actor_critic_kernel,
                               action_bound=float(action_bound))

    macs = S_pad * _H1 + _H1 * _H2 + _H2 * _OUT
    cost = pl.CostEstimate(
        flops=2 * B * macs,
        transcendentals=B * (_H1 + _H2 + _OUT),
        bytes_accessed=(B * S_pad * 4 + B * _OUT * 4     # x read + packed out write
                        + 2 * macs                       # bf16 packed weights
                        + 8 * _H1 * 4),                  # bias slab
    )

    out = pl.pallas_call(
        kernel,
        out_shape=jax.ShapeDtypeStruct((B, _OUT), jnp.float32),
        grid_spec=pltpu.PrefetchScalarGridSpec(
            num_scalar_prefetch=0,
            grid=(n_tiles,),
            in_specs=[
                pl.BlockSpec((TB, S_pad), lambda i: (i, 0)),    # x (batch-tiled)
                pl.BlockSpec((S_pad, _H1), lambda i: (0, 0)),   # w1 (VMEM-resident)
                pl.BlockSpec((_H1, _H2), lambda i: (0, 0)),     # w2 (VMEM-resident)
                pl.BlockSpec((_H2, _OUT), lambda i: (0, 0)),    # w3 (VMEM-resident)
                pl.BlockSpec((8, _H1), lambda i: (0, 0)),       # bias slab (f32)
            ],
            out_specs=pl.BlockSpec((TB, _OUT), lambda i: (i, 0)),
        ),
        compiler_params=pltpu.CompilerParams(
            dimension_semantics=("parallel",)),
        cost_estimate=cost,
    )(x, packed["w1"], packed["w2"], packed["w3"], packed["b"])

    mu = out[:, :A]
    value = out[:, _VALUE_LANE:_VALUE_LANE + 1]
    # std = exp(constant_logstd), broadcast to mu's shape (independent of x).
    std = jnp.broadcast_to(jnp.exp(packed["logstd"]).reshape(1, A), (B, A))
    return mu, std, value


def init_params(key, state_dim, action_dim):
    """Deterministic init matching the PyTorch module:
    Linear weights ~ Normal(0, 0.1), biases = 0.1, constant_logstd = 0.
    Logical (unpadded) params, weights stored transposed as [in, out]."""
    keys = jax.random.split(key, 6)

    def lin(k, fan_in, fan_out):
        w = 0.1 * jax.random.normal(k, (fan_in, fan_out), dtype=jnp.float32)
        b = jnp.full((1, fan_out), 0.1, dtype=jnp.float32)
        return w, b

    cw1, cb1 = lin(keys[0], state_dim, 200)
    cw2, cb2 = lin(keys[1], 200, 50)
    cw3, cb3 = lin(keys[2], 50, 1)
    aw1, ab1 = lin(keys[3], state_dim, 100)
    aw2, ab2 = lin(keys[4], 100, 50)
    aw3, ab3 = lin(keys[5], 50, action_dim)
    logstd = jnp.zeros((1, action_dim), dtype=jnp.float32)

    return dict(
        cw1=cw1, cb1=cb1, cw2=cw2, cb2=cb2, cw3=cw3, cb3=cb3,
        aw1=aw1, ab1=ab1, aw2=aw2, ab2=ab2, aw3=aw3, ab3=ab3,
        logstd=logstd,
    )


def pack_params(params, state_dim, action_dim):
    """Zero-pad and pack the logical params into the kernel's fused (bf16) layout."""
    assert action_dim <= _VALUE_LANE, "packed output layout assumes action_dim <= 64"
    S_pad = _round_up(state_dim, 8)
    f32 = jnp.float32

    # Layer 1: side-by-side  [S_pad, 384]   (critic lanes 0:200, actor lanes 256:356)
    w1 = jnp.zeros((S_pad, _H1), f32)
    w1 = w1.at[:state_dim, 0:200].set(params["cw1"])
    w1 = w1.at[:state_dim, _H1C:_H1C + 100].set(params["aw1"])

    # Layer 2: block-diagonal [384, 128]    (critic h2 -> lanes 0:50, actor h2 -> 64:114)
    w2 = jnp.zeros((_H1, _H2), f32)
    w2 = w2.at[0:200, 0:50].set(params["cw2"])
    w2 = w2.at[_H1C:_H1C + 100, _H2A_OFF:_H2A_OFF + 50].set(params["aw2"])

    # Layer 3: block-diagonal [128, 128]    (mu -> lanes 0:A, value -> lane 64)
    w3 = jnp.zeros((_H2, _OUT), f32)
    w3 = w3.at[0:50, _VALUE_LANE:_VALUE_LANE + 1].set(params["cw3"])
    w3 = w3.at[_H2A_OFF:_H2A_OFF + 50, 0:action_dim].set(params["aw3"])

    # Bias slab [8, 384] f32: row 0 = layer-1 biases, row 1 = layer-2, row 2 = layer-3.
    b = jnp.zeros((8, _H1), f32)
    b = b.at[0, 0:200].set(params["cb1"][0])
    b = b.at[0, _H1C:_H1C + 100].set(params["ab1"][0])
    b = b.at[1, 0:50].set(params["cb2"][0])
    b = b.at[1, _H2A_OFF:_H2A_OFF + 50].set(params["ab2"][0])
    b = b.at[2, 0:action_dim].set(params["ab3"][0])
    b = b.at[2, _VALUE_LANE].set(params["cb3"][0, 0])

    return dict(w1=w1.astype(jnp.bfloat16),
                w2=w2.astype(jnp.bfloat16),
                w3=w3.astype(jnp.bfloat16),
                b=b,
                logstd=params["logstd"])


def reference_forward(x, params, action_bound):
    """Pure-JAX f32 reference (unfused, unpadded) for correctness check."""
    h = jnp.tanh(x @ params["cw1"] + params["cb1"])
    h = jnp.tanh(h @ params["cw2"] + params["cb2"])
    value = h @ params["cw3"] + params["cb3"]

    a = jnp.tanh(x @ params["aw1"] + params["ab1"])
    a = jnp.tanh(a @ params["aw2"] + params["ab2"])
    mu = jnp.tanh(a @ params["aw3"] + params["ab3"]) * action_bound
    std = jnp.exp(params["logstd"]) * jnp.ones_like(mu)
    return mu, std, value


if __name__ == "__main__":
    key = jax.random.PRNGKey(0)
    k_x, k_p = jax.random.split(key)

    batch = 8
    state_dim = 16
    action_dim = 4
    action_bound = 2.0

    x = jax.random.normal(k_x, (batch, state_dim), dtype=jnp.float32)
    params = init_params(k_p, state_dim, action_dim)
    packed = pack_params(params, state_dim, action_dim)

    mu, std, value = actor_critic_forward(x, packed, action_bound)
    jax.block_until_ready((mu, std, value))

    mu_ref, std_ref, value_ref = reference_forward(x, params, action_bound)
    assert mu.shape == (batch, action_dim)
    assert std.shape == (batch, action_dim)
    assert value.shape == (batch, 1)
    # bf16 MXU operands -> loosened tolerance vs the f32 reference.
    assert jnp.allclose(mu, mu_ref, atol=5e-2, rtol=5e-2)
    assert jnp.allclose(std, std_ref, atol=1e-5, rtol=1e-5)
    assert jnp.allclose(value, value_ref, atol=5e-2, rtol=5e-2)

    # Ragged-batch path (grid = cdiv(B, TB), masked last tile): B=20, TB=16 -> 2 tiles.
    x2 = jax.random.normal(jax.random.PRNGKey(3), (20, state_dim), dtype=jnp.float32)
    mu2, std2, value2 = actor_critic_forward(x2, packed, action_bound, batch_tile=16)
    jax.block_until_ready((mu2, std2, value2))
    mu2_ref, _, value2_ref = reference_forward(x2, params, action_bound)
    assert jnp.allclose(mu2, mu2_ref, atol=5e-2, rtol=5e-2)
    assert jnp.allclose(value2, value2_ref, atol=5e-2, rtol=5e-2)

    print("KERNEL_OK")
</pallas_src>

<mosaic_0001>
module attributes {stable_mosaic.version = 11 : i64} {
  func.func @_actor_critic_kernel(%arg0: i32, %arg1: memref<8x16xf32, #tpu.memory_space<vmem>>, %arg2: memref<16x384xbf16, #tpu.memory_space<vmem>>, %arg3: memref<384x128xbf16, #tpu.memory_space<vmem>>, %arg4: memref<128x128xbf16, #tpu.memory_space<vmem>>, %arg5: memref<8x384xf32, #tpu.memory_space<vmem>>, %arg6: memref<8x128xf32, #tpu.memory_space<vmem>>) attributes {dimension_semantics = [#tpu.dimension_semantics<parallel>], iteration_bounds = array<i64: 1>, scalar_prefetch = 0 : i64, scratch_operands = 0 : i64, tpu.core_type = #tpu.core_type<tc>, window_params = [{transform_indices = @transform_0, window_bounds = array<i64: 8, 16>}, {pipeline_mode = #tpu.pipeline_mode<synchronous>, transform_indices = @transform_1, window_bounds = array<i64: 16, 384>}, {pipeline_mode = #tpu.pipeline_mode<synchronous>, transform_indices = @transform_2, window_bounds = array<i64: 384, 128>}, {pipeline_mode = #tpu.pipeline_mode<synchronous>, transform_indices = @transform_3, window_bounds = array<i64: 128, 128>}, {pipeline_mode = #tpu.pipeline_mode<synchronous>, transform_indices = @transform_4, window_bounds = array<i64: 8, 384>}, {transform_indices = @transform_5, window_bounds = array<i64: 8, 128>}]} {
    %c0 = arith.constant 0 : index
    %c0_0 = arith.constant 0 : index
    %0 = vector.load %arg1[%c0, %c0_0] : memref<8x16xf32, #tpu.memory_space<vmem>>, vector<8x16xf32>
    %1 = arith.truncf %0 : vector<8x16xf32> to vector<8x16xbf16>
    %c0_1 = arith.constant 0 : index
    %c0_2 = arith.constant 0 : index
    %2 = vector.load %arg2[%c0_1, %c0_2] : memref<16x384xbf16, #tpu.memory_space<vmem>>, vector<16x384xbf16>
    %cst = arith.constant dense<0.000000e+00> : vector<8x384xf32>
    %3 = tpu.matmul %1, %2, %cst {dimension_numbers = #tpu.dot_dimension_numbers<[1], [0], [0], [1], [0, 0, 1, 1], [], []>} : vector<8x16xbf16>, vector<16x384xbf16>, vector<8x384xf32> -> vector<8x384xf32>
    %c0_3 = arith.constant 0 : index
    %c0_4 = arith.constant 0 : index
    %4 = vector.load %arg5[%c0_3, %c0_4] : memref<8x384xf32, #tpu.memory_space<vmem>>, vector<1x384xf32>
    %5 = vector.broadcast %4 : vector<1x384xf32> to vector<8x384xf32>
    %6 = arith.addf %3, %5 : vector<8x384xf32>
    %7 = math.tanh %6 : vector<8x384xf32>
    %8 = arith.truncf %7 : vector<8x384xf32> to vector<8x384xbf16>
    %c0_5 = arith.constant 0 : index
    %c0_6 = arith.constant 0 : index
    %9 = vector.load %arg3[%c0_5, %c0_6] : memref<384x128xbf16, #tpu.memory_space<vmem>>, vector<384x128xbf16>
    %cst_7 = arith.constant dense<0.000000e+00> : vector<8x128xf32>
    %10 = tpu.matmul %8, %9, %cst_7 {dimension_numbers = #tpu.dot_dimension_numbers<[1], [0], [0], [1], [0, 0, 1, 1], [], []>} : vector<8x384xbf16>, vector<384x128xbf16>, vector<8x128xf32> -> vector<8x128xf32>
    %c1 = arith.constant 1 : index
    %c0_8 = arith.constant 0 : index
    %11 = vector.load %arg5[%c1, %c0_8] : memref<8x384xf32, #tpu.memory_space<vmem>>, vector<1x128xf32>
    %12 = vector.broadcast %11 : vector<1x128xf32> to vector<8x128xf32>
    %13 = arith.addf %10, %12 : vector<8x128xf32>
    %14 = math.tanh %13 : vector<8x128xf32>
    %15 = arith.truncf %14 : vector<8x128xf32> to vector<8x128xbf16>
    %c0_9 = arith.constant 0 : index
    %c0_10 = arith.constant 0 : index
    %16 = vector.load %arg4[%c0_9, %c0_10] : memref<128x128xbf16, #tpu.memory_space<vmem>>, vector<128x128xbf16>
    %cst_11 = arith.constant dense<0.000000e+00> : vector<8x128xf32>
    %17 = tpu.matmul %15, %16, %cst_11 {dimension_numbers = #tpu.dot_dimension_numbers<[1], [0], [0], [1], [0, 0, 1, 1], [], []>} : vector<8x128xbf16>, vector<128x128xbf16>, vector<8x128xf32> -> vector<8x128xf32>
    %c2 = arith.constant 2 : index
    %c0_12 = arith.constant 0 : index
    %18 = vector.load %arg5[%c2, %c0_12] : memref<8x384xf32, #tpu.memory_space<vmem>>, vector<1x128xf32>
    %19 = vector.broadcast %18 : vector<1x128xf32> to vector<8x128xf32>
    %20 = arith.addf %17, %19 : vector<8x128xf32>
    %21 = tpu.iota {dimensions = array<i32: 1>} : vector<8x128xi32>
    %c64_i32 = arith.constant 64 : i32
    %22 = vector.broadcast %c64_i32 : i32 to vector<8x128xi32>
    %23 = arith.cmpi slt, %21, %22 : vector<8x128xi32>
    %24 = math.tanh %20 : vector<8x128xf32>
    %cst_13 = arith.constant 2.000000e+00 : f32
    %25 = vector.broadcast %cst_13 : f32 to vector<8x128xf32>
    %26 = arith.mulf %24, %25 : vector<8x128xf32>
    %27 = arith.select %23, %26, %20 : vector<8x128xi1>, vector<8x128xf32>
    %c0_14 = arith.constant 0 : index
    %c0_15 = arith.constant 0 : index
    %28 = vector.load %arg6[%c0_14, %c0_15] : memref<8x128xf32, #tpu.memory_space<vmem>>, vector<8x128xf32>
    tpu.vector_store %arg6[%c0_14, %c0_15], %27 {strides = array<i32>} : memref<8x128xf32, #tpu.memory_space<vmem>>, vector<8x128xf32>,
    return
  }
  func.func @transform_0(%arg0: i32) -> (i32, i32) {
    %c0_i32 = arith.constant 0 : i32
    %c0_i32_0 = arith.constant 0 : i32
    return %arg0, %c0_i32 : i32, i32
  }
  func.func @transform_1(%arg0: i32) -> (i32, i32) {
    %c0_i32 = arith.constant 0 : i32
    %c0_i32_0 = arith.constant 0 : i32
    %c0_i32_1 = arith.constant 0 : i32
    return %c0_i32, %c0_i32_0 : i32, i32
  }
  func.func @transform_2(%arg0: i32) -> (i32, i32) {
    %c0_i32 = arith.constant 0 : i32
    %c0_i32_0 = arith.constant 0 : i32
    %c0_i32_1 = arith.constant 0 : i32
    return %c0_i32, %c0_i32_0 : i32, i32
  }
  func.func @transform_3(%arg0: i32) -> (i32, i32) {
    %c0_i32 = arith.constant 0 : i32
    %c0_i32_0 = arith.constant 0 : i32
    %c0_i32_1 = arith.constant 0 : i32
    return %c0_i32, %c0_i32_0 : i32, i32
  }
  func.func @transform_4(%arg0: i32) -> (i32, i32) {
    %c0_i32 = arith.constant 0 : i32
    %c0_i32_0 = arith.constant 0 : i32
    %c0_i32_1 = arith.constant 0 : i32
    return %c0_i32, %c0_i32_0 : i32, i32
  }
  func.func @transform_5(%arg0: i32) -> (i32, i32) {
    %c0_i32 = arith.constant 0 : i32
    %c0_i32_0 = arith.constant 0 : i32
    return %arg0, %c0_i32 : i32, i32
  }
}

</mosaic_0001>

<llo_original>
// kernel: tpu_custom_call.1
$region0: #{tpu_custom_call.1}
  #allocation0 [shape = 'u32[]', space=smem, size = 0x4, offset = 0x4, fixed_abs, tag = 'smem constant byte address 0x4 - core index']
  #allocation1 [shape = 'u32[144,128]{1,0:T(1,128)}', space=vmem, size = 0x12000, scoped, tag = 'internal scratch']
  %s0 = inlined_call_operand.hbm [shape: f32[8,16], index: 0, kind: input, shape index: {}]
  %s1 = inlined_call_operand.hbm [shape: bf16[16,384], index: 1, kind: input, shape index: {}]
  %s2 = inlined_call_operand.hbm [shape: bf16[384,128], index: 2, kind: input, shape index: {}]
  %s3 = inlined_call_operand.hbm [shape: bf16[128,128], index: 3, kind: input, shape index: {}]
  %s4 = inlined_call_operand.hbm [shape: f32[8,384], index: 4, kind: input, shape index: {}]
  %s5 = inlined_call_operand.hbm [shape: f32[8,128], index: 5, kind: output, shape index: {}]
  %s6 = sld [smem:[#allocation0]]
  $region50: #{tpu_custom_call.1} parent=0
    _
  %s8 = ssub.s32 1, %s6
  %s9 = scalar_select 0, %s8, %s6
  $region1: #{tpu_custom_call.1} parent=0
    #allocation2 [shape = 'u8[4096]{0}', space=vmem, size = 0x1000, scoped, tag = 'input window, operand 0, single buffered']
    #allocation3 [shape = 's32[1]{0}', space=sflag, size = 0x4, scoped, tag = 'scoped memory for tpu_custom_call.1']
    #allocation4 [shape = 's32[1]{0}', space=sflag, size = 0x4, scoped, tag = 'scoped memory for tpu_custom_call.1']
    #allocation5 [shape = 'u8[12288]{0}', space=vmem, size = 0x3000, scoped, tag = 'input window, operand 1, single buffered']
    #allocation6 [shape = 's32[1]{0}', space=sflag, size = 0x4, scoped, tag = 'scoped memory for tpu_custom_call.1']
    #allocation7 [shape = 'u8[98304]{0}', space=vmem, size = 0x18000, scoped, tag = 'input window, operand 2, single buffered']
    #allocation8 [shape = 'u8[32768]{0}', space=vmem, size = 0x8000, scoped, tag = 'input window, operand 3, single buffered']
    #allocation9 [shape = 's32[1]{0}', space=sflag, size = 0x4, scoped, tag = 'scoped memory for tpu_custom_call.1']
    #allocation10 [shape = 'u8[12288]{0}', space=vmem, size = 0x3000, scoped, tag = 'input window, operand 4, single buffered']
    #allocation11 [shape = 'u8[4096]{0}', space=vmem, size = 0x1000, scoped, tag = 'output window, operand 0, single buffered']
    %10 = vsyncpa [#allocation3], 0
    %11 = vsyncpa [#allocation6], 0
    %12 = vsyncpa [#allocation9], 0
    %13 = vsyncpa [#allocation4], 0
    // Predicated region
    $region2: #{tpu_custom_call.1} parent=1 // pred_check
      _
    $region3: #{tpu_custom_call.1} parent=1 // pred_check_branch
      %15 = sbr.rel (0) target = $region5
    $region4: #{tpu_custom_call.1} parent=1 // pred_region
      %s17 = ssub.s32 128, 128
      %18 = vsyncadd [#allocation3], %s17
      %s20 = sshll.u32 [#allocation2], 4
      %s21 = int_to_ptr.vmem [resolvable:$true] %s20
      %23 = dma.hbm_to_vmem [thread:$0]  %s0, 128, %s21, [#allocation3]
    $region5: #{tpu_custom_call.1} parent=1 // pred_fallthru
      _
    // Predicated region
    $region6: #{tpu_custom_call.1} parent=1 // pred_check
      _
    $region7: #{tpu_custom_call.1} parent=1 // pred_check_branch
      %25 = sbr.rel (0) target = $region9
    $region8: #{tpu_custom_call.1} parent=1 // pred_region
      %s27 = ssub.s32 384, 384
      %28 = vsyncadd [#allocation6], %s27
      %s29 = sshll.u32 [#allocation5], 4
      %s30 = int_to_ptr.vmem [resolvable:$true] %s29
      %35 = dma.hbm_to_vmem [thread:$0]  %s1, 384, %s30, [#allocation6], 192, 192, 12
    $region9: #{tpu_custom_call.1} parent=1 // pred_fallthru
      _
    // Predicated region
    $region10: #{tpu_custom_call.1} parent=1 // pred_check
      _
    $region11: #{tpu_custom_call.1} parent=1 // pred_check_branch
      %37 = sbr.rel (0) target = $region13
    $region12: #{tpu_custom_call.1} parent=1 // pred_region
      %s39 = ssub.s32 3072, 3072
      %40 = vsyncadd [#allocation6], %s39
      %s41 = sshll.u32 [#allocation7], 4
      %s42 = int_to_ptr.vmem [resolvable:$true] %s41
      %47 = dma.hbm_to_vmem [thread:$0]  %s2, 3072, %s42, [#allocation6], 64, 64, 4
    $region13: #{tpu_custom_call.1} parent=1 // pred_fallthru
      _
    // Predicated region
    $region14: #{tpu_custom_call.1} parent=1 // pred_check
      _
    $region15: #{tpu_custom_call.1} parent=1 // pred_check_branch
      %49 = sbr.rel (0) target = $region17
    $region16: #{tpu_custom_call.1} parent=1 // pred_region
      %s51 = ssub.s32 1024, 1024
      %52 = vsyncadd [#allocation9], %s51
      %s53 = sshll.u32 [#allocation8], 4
      %s54 = int_to_ptr.vmem [resolvable:$true] %s53
      %59 = dma.hbm_to_vmem [thread:$0]  %s3, 1024, %s54, [#allocation9], 64, 64, 4
    $region17: #{tpu_custom_call.1} parent=1 // pred_fallthru
      _
    // Predicated region
    $region18: #{tpu_custom_call.1} parent=1 // pred_check
      _
    $region19: #{tpu_custom_call.1} parent=1 // pred_check_branch
      %61 = sbr.rel (0) target = $region21
    $region20: #{tpu_custom_call.1} parent=1 // pred_region
      %s63 = ssub.s32 384, 384
      %64 = vsyncadd [#allocation9], %s63
      %s66 = sshll.u32 [#allocation10], 4
      %s67 = int_to_ptr.vmem [resolvable:$true] %s66
      %69 = dma.hbm_to_vmem [thread:$0]  %s4, 384, %s67, [#allocation9]
    $region21: #{tpu_custom_call.1} parent=1 // pred_fallthru
      _
    // Predicated region
    $region22: #{tpu_custom_call.1} parent=1 // pred_check
      _
    $region23: #{tpu_custom_call.1} parent=1 // pred_check_branch
      %71 = sbr.rel (0) target = $region25
    $region24: #{tpu_custom_call.1} parent=1 // pred_region
      %72 = dma.done [#allocation3], 128
    $region25: #{tpu_custom_call.1} parent=1 // pred_fallthru
      _
    // Predicated region
    $region26: #{tpu_custom_call.1} parent=1 // pred_check
      _
    $region27: #{tpu_custom_call.1} parent=1 // pred_check_branch
      %74 = sbr.rel (0) target = $region29
    $region28: #{tpu_custom_call.1} parent=1 // pred_region
      %75 = dma.done [#allocation6], 384
    $region29: #{tpu_custom_call.1} parent=1 // pred_fallthru
      _
    // Predicated region
    $region30: #{tpu_custom_call.1} parent=1 // pred_check
      _
    $region31: #{tpu_custom_call.1} parent=1 // pred_check_branch
      %77 = sbr.rel (0) target = $region33
    $region32: #{tpu_custom_call.1} parent=1 // pred_region
      %78 = dma.done [#allocation6], 3072
    $region33: #{tpu_custom_call.1} parent=1 // pred_fallthru
      _
    // Predicated region
    $region34: #{tpu_custom_call.1} parent=1 // pred_check
      _
    $region35: #{tpu_custom_call.1} parent=1 // pred_check_branch
      %80 = sbr.rel (0) target = $region37
    $region36: #{tpu_custom_call.1} parent=1 // pred_region
      %81 = dma.done [#allocation9], 1024
    $region37: #{tpu_custom_call.1} parent=1 // pred_fallthru
      _
    // Predicated region
    $region38: #{tpu_custom_call.1} parent=1 // pred_check
      _
    $region39: #{tpu_custom_call.1} parent=1 // pred_check_branch
      %83 = sbr.rel (0) target = $region41
    $region40: #{tpu_custom_call.1} parent=1 // pred_region
      %84 = dma.done [#allocation9], 384
    $region41: #{tpu_custom_call.1} parent=1 // pred_fallthru
      _
    %v86 = vld [vmem:[#allocation2] sm:$0xff]
    %v87 = vpack.c.bf16 %v86, %v86
    %v88 = vld [vmem:[#allocation5] sm:$0xff]
    %v89 = vld [vmem:[#allocation5 + $0x8] sm:$0xf]
    %v90 = vld [vmem:[#allocation5 + $0xc] sm:$0xff]
    %v91 = vld [vmem:[#allocation5 + $0x14] sm:$0xf]
    %v92 = vld [vmem:[#allocation10] ss:$8 sm:$0x7]
    %v94 = vlaneseq
    %v95 = vshrl.u32 %v94, 7
    %v96 = vsub.s32 0, %v95
    %v97 = vrot.slane %v92, %v96
    %v98 = vlaneseq
    %v99 = vshrl.u32 %v98, 7
    %v100 = vsub.s32 1, %v99
    %v101 = vrot.slane %v92, %v100
    %v102 = vlaneseq
    %v103 = vshrl.u32 %v102, 7
    %v104 = vsub.s32 2, %v103
    %v105 = vrot.slane %v92, %v104
    %v113 = vunpack.c.l.b16 %v88
    %v114 = vunpack.c.h.b16 %v88
    %v115 = vunpack.c.l.b16 %v89
    %v116 = vunpack.c.l.b16 %v90
    %v117 = vunpack.c.h.b16 %v90
    %v118 = vunpack.c.l.b16 %v91
    %v119 = vpack.c.b16 %v116, %v113
    %v120 = vpack.c.b16 %v117, %v114
    %v121 = vpack.c.b16 %v118, %v115
    %vm125 = vcmask 130048
    %v127 = vsel %vm125, %v87, 0
    %129 = vmatprep.subr.bf16.mxu0 %v120
    %130 = vmatpush1.bf16.msra.mxu0 %v119
    %131 = vmatprep.subr.bf16.mxu0 0
    %132 = vmatpush1.bf16.msra.mxu0 0
    %133 = vmatprep.subr.bf16.mxu0 0
    %134 = vmatpush1.bf16.msra.mxu0 0
    %135 = vmatprep.subr.bf16.mxu0 0
    %136 = vmatpush1.bf16.msra.mxu0 0
    %137 = vmatprep.subr.bf16.mxu0 0
    %138 = vmatpush1.bf16.msra.mxu0 0
    %139 = vmatprep.subr.bf16.mxu0 0
    %140 = vmatpush1.bf16.msra.mxu0 0
    %141 = vmatprep.subr.bf16.mxu0 0
    %142 = vmatpush1.bf16.msra.mxu0 0
    %143 = vmatprep.subr.bf16.mxu0 0
    %144 = vmatpush1.bf16.msra.mxu0 0
    %145 = vmatprep.subr.bf16.mxu0 0
    %146 = vmatpush1.bf16.msra.mxu0 0
    %147 = vmatprep.subr.bf16.mxu0 0
    %148 = vmatpush1.bf16.msra.mxu0 0
    %149 = vmatprep.subr.bf16.mxu0 0
    %150 = vmatpush1.bf16.msra.mxu0 0
    %151 = vmatprep.subr.bf16.mxu0 0
    %152 = vmatpush1.bf16.msra.mxu0 0
    %153 = vmatprep.subr.bf16.mxu0 0
    %154 = vmatpush1.bf16.msra.mxu0 0
    %155 = vmatprep.subr.bf16.mxu0 0
    %156 = vmatpush1.bf16.msra.mxu0 0
    %157 = vmatprep.subr.bf16.mxu0 0
    %158 = vmatpush1.bf16.msra.mxu0 0
    %159 = vmatprep.subr.bf16.mxu0 0
    %160 = vmatpush1.bf16.msra.mxu0 0
    %161 = vmatprep.mubr.bf16.mxu0 0
    %162 = vmatmul.mubr.bf16.gmra.mrb[0].mxu0 %v127
    %v163 = vpop.f32.mrb[0].mxu0
    %v164 = vadd.f32 %v97, %v163
    %v165 = vpop.f32.mrb[0].mxu0
    %v166 = vadd.f32 %v101, %v165
    %v167 = vpop.f32.mrb[0].mxu0
    %v168 = vpop.f32.mrb[0].mxu0
    %169 = vdwg.mxu0
    %170 = vmatprep.subr.bf16.mxu0 0
    %171 = vmatpush1.bf16.msra.mxu0 %v121
    %172 = vmatprep.subr.bf16.mxu0 0
    %173 = vmatpush1.bf16.msra.mxu0 0
    %174 = vmatprep.subr.bf16.mxu0 0
    %175 = vmatpush1.bf16.msra.mxu0 0
    %176 = vmatprep.subr.bf16.mxu0 0
    %177 = vmatpush1.bf16.msra.mxu0 0
    %178 = vmatprep.subr.bf16.mxu0 0
    %179 = vmatpush1.bf16.msra.mxu0 0
    %180 = vmatprep.subr.bf16.mxu0 0
    %181 = vmatpush1.bf16.msra.mxu0 0
    %182 = vmatprep.subr.bf16.mxu0 0
    %183 = vmatpush1.bf16.msra.mxu0 0
    %184 = vmatprep.subr.bf16.mxu0 0
    %185 = vmatpush1.bf16.msra.mxu0 0
    %186 = vmatprep.subr.bf16.mxu0 0
    %187 = vmatpush1.bf16.msra.mxu0 0
    %188 = vmatprep.subr.bf16.mxu0 0
    %189 = vmatpush1.bf16.msra.mxu0 0
    %190 = vmatprep.subr.bf16.mxu0 0
    %191 = vmatpush1.bf16.msra.mxu0 0
    %192 = vmatprep.subr.bf16.mxu0 0
    %193 = vmatpush1.bf16.msra.mxu0 0
    %194 = vmatprep.subr.bf16.mxu0 0
    %195 = vmatpush1.bf16.msra.mxu0 0
    %196 = vmatprep.subr.bf16.mxu0 0
    %197 = vmatpush1.bf16.msra.mxu0 0
    %198 = vmatprep.subr.bf16.mxu0 0
    %199 = vmatpush1.bf16.msra.mxu0 0
    %200 = vmatprep.subr.bf16.mxu0 0
    %201 = vmatpush1.bf16.msra.mxu0 0
    %202 = vmatprep.mubr.bf16.mxu0 0
    %203 = vmatmul.mubr.bf16.gmra.mrb[0].mxu0 %v127
    %v204 = vpop.f32.mrb[0].mxu0
    %v205 = vadd.f32 %v105, %v204
    %v206 = vpop.f32.mrb[0].mxu0
    %v207 = vpop.f32.mrb[0].mxu0
    %v208 = vpop.f32.mrb[0].mxu0
    %209 = vdwg.mxu0
    %v210 = vtanh.pop %v164
    %v211 = vtanh.pop %v166
    %v212 = vtanh.pop %v205
    %v213 = vpack.c.bf16 %v210, %v210
    %v214 = vpack.c.bf16 %v211, %v211
    %v215 = vpack.c.bf16 %v212, %v212
    %v216 = vld [vmem:[#allocation7] sm:$0xf]
    %v217 = vld [vmem:[#allocation7 + $0x4] sm:$0xf]
    %v218 = vld [vmem:[#allocation7 + $0x8] sm:$0xf]
    %v219 = vld [vmem:[#allocation7 + $0xc] sm:$0xf]
    %v220 = vld [vmem:[#allocation7 + $0x10] sm:$0xf]
    %v221 = vld [vmem:[#allocation7 + $0x14] sm:$0xf]
    %v222 = vld [vmem:[#allocation7 + $0x18] sm:$0xf]
    %v223 = vld [vmem:[#allocation7 + $0x1c] sm:$0xf]
    %v224 = vld [vmem:[#allocation7 + $0x20] sm:$0xf]
    %v225 = vld [vmem:[#allocation7 + $0x24] sm:$0xf]
    %v226 = vld [vmem:[#allocation7 + $0x28] sm:$0xf]
    %v227 = vld [vmem:[#allocation7 + $0x2c] sm:$0xf]
    %v228 = vld [vmem:[#allocation7 + $0x30] sm:$0xf]
    %v229 = vld [vmem:[#allocation7 + $0x34] sm:$0xf]
    %v230 = vld [vmem:[#allocation7 + $0x38] sm:$0xf]
    %v231 = vld [vmem:[#allocation7 + $0x3c] sm:$0xf]
    %v232 = vld [vmem:[#allocation7 + $0x40] sm:$0xf]
    %v233 = vld [vmem:[#allocation7 + $0x44] sm:$0xf]
    %v234 = vld [vmem:[#allocation7 + $0x48] sm:$0xf]
    %v235 = vld [vmem:[#allocation7 + $0x4c] sm:$0xf]
    %v236 = vld [vmem:[#allocation7 + $0x50] sm:$0xf]
    %v237 = vld [vmem:[#allocation7 + $0x54] sm:$0xf]
    %v238 = vld [vmem:[#allocation7 + $0x58] sm:$0xf]
    %v239 = vld [vmem:[#allocation7 + $0x5c] sm:$0xf]
    %v240 = vld [vmem:[#allocation7 + $0x60] sm:$0xf]
    %v241 = vld [vmem:[#allocation7 + $0x64] sm:$0xf]
    %v242 = vld [vmem:[#allocation7 + $0x68] sm:$0xf]
    %v243 = vld [vmem:[#allocation7 + $0x6c] sm:$0xf]
    %v244 = vld [vmem:[#allocation7 + $0x70] sm:$0xf]
    %v245 = vld [vmem:[#allocation7 + $0x74] sm:$0xf]
    %v246 = vld [vmem:[#allocation7 + $0x78] sm:$0xf]
    %v247 = vld [vmem:[#allocation7 + $0x7c] sm:$0xf]
    %v248 = vld [vmem:[#allocation7 + $0x80] sm:$0xf]
    %v249 = vld [vmem:[#allocation7 + $0x84] sm:$0xf]
    %v250 = vld [vmem:[#allocation7 + $0x88] sm:$0xf]
    %v251 = vld [vmem:[#allocation7 + $0x8c] sm:$0xf]
    %v252 = vld [vmem:[#allocation7 + $0x90] sm:$0xf]
    %v253 = vld [vmem:[#allocation7 + $0x94] sm:$0xf]
    %v254 = vld [vmem:[#allocation7 + $0x98] sm:$0xf]
    %v255 = vld [vmem:[#allocation7 + $0x9c] sm:$0xf]
    %v256 = vld [vmem:[#allocation7 + $0xa0] sm:$0xf]
    %v257 = vld [vmem:[#allocation7 + $0xa4] sm:$0xf]
    %v258 = vld [vmem:[#allocation7 + $0xa8] sm:$0xf]
    %v259 = vld [vmem:[#allocation7 + $0xac] sm:$0xf]
    %v260 = vld [vmem:[#allocation7 + $0xb0] sm:$0xf]
    %v261 = vld [vmem:[#allocation7 + $0xb4] sm:$0xf]
    %v262 = vld [vmem:[#allocation7 + $0xb8] sm:$0xf]
    %v263 = vld [vmem:[#allocation7 + $0xbc] sm:$0xf]
    %v264 = vld [vmem:[#allocation10 + $0x1] ss:$0 sm:$0xff]
    %v313 = vunpack.c.l.b16 %v216
    %v314 = vunpack.c.l.b16 %v217
    %v315 = vunpack.c.l.b16 %v218
    %v316 = vunpack.c.l.b16 %v219
    %v317 = vunpack.c.l.b16 %v220
    %v318 = vunpack.c.l.b16 %v221
    %v319 = vunpack.c.l.b16 %v222
    %v320 = vunpack.c.l.b16 %v223
    %v321 = vunpack.c.l.b16 %v224
    %v322 = vunpack.c.l.b16 %v225
    %v323 = vunpack.c.l.b16 %v226
    %v324 = vunpack.c.l.b16 %v227
    %v325 = vunpack.c.l.b16 %v228
    %v326 = vunpack.c.l.b16 %v229
    %v327 = vunpack.c.l.b16 %v230
    %v328 = vunpack.c.l.b16 %v231
    %v329 = vunpack.c.l.b16 %v232
    %v330 = vunpack.c.l.b16 %v233
    %v331 = vunpack.c.l.b16 %v234
    %v332 = vunpack.c.l.b16 %v235
    %v333 = vunpack.c.l.b16 %v236
    %v334 = vunpack.c.l.b16 %v237
    %v335 = vunpack.c.l.b16 %v238
    %v336 = vunpack.c.l.b16 %v239
    %v337 = vunpack.c.l.b16 %v240
    %v338 = vunpack.c.l.b16 %v241
    %v339 = vunpack.c.l.b16 %v242
    %v340 = vunpack.c.l.b16 %v243
    %v341 = vunpack.c.l.b16 %v244
    %v342 = vunpack.c.l.b16 %v245
    %v343 = vunpack.c.l.b16 %v246
    %v344 = vunpack.c.l.b16 %v247
    %v345 = vunpack.c.l.b16 %v248
    %v346 = vunpack.c.l.b16 %v249
    %v347 = vunpack.c.l.b16 %v250
    %v348 = vunpack.c.l.b16 %v251
    %v349 = vunpack.c.l.b16 %v252
    %v350 = vunpack.c.l.b16 %v253
    %v351 = vunpack.c.l.b16 %v254
    %v352 = vunpack.c.l.b16 %v255
    %v353 = vunpack.c.l.b16 %v256
    %v354 = vunpack.c.l.b16 %v257
    %v355 = vunpack.c.l.b16 %v258
    %v356 = vunpack.c.l.b16 %v259
    %v357 = vunpack.c.l.b16 %v260
    %v358 = vunpack.c.l.b16 %v261
    %v359 = vunpack.c.l.b16 %v262
    %v360 = vunpack.c.l.b16 %v263
    %v361 = vpack.c.b16 %v314, %v313
    %v362 = vpack.c.b16 %v316, %v315
    %v363 = vpack.c.b16 %v318, %v317
    %v364 = vpack.c.b16 %v320, %v319
    %v365 = vpack.c.b16 %v322, %v321
    %v366 = vpack.c.b16 %v324, %v323
    %v367 = vpack.c.b16 %v326, %v325
    %v368 = vpack.c.b16 %v328, %v327
    %v369 = vpack.c.b16 %v330, %v329
    %v370 = vpack.c.b16 %v332, %v331
    %v371 = vpack.c.b16 %v334, %v333
    %v372 = vpack.c.b16 %v336, %v335
    %v373 = vpack.c.b16 %v338, %v337
    %v374 = vpack.c.b16 %v340, %v339
    %v375 = vpack.c.b16 %v342, %v341
    %v376 = vpack.c.b16 %v344, %v343
    %v377 = vpack.c.b16 %v346, %v345
    %v378 = vpack.c.b16 %v348, %v347
    %v379 = vpack.c.b16 %v350, %v349
    %v380 = vpack.c.b16 %v352, %v351
    %v381 = vpack.c.b16 %v354, %v353
    %v382 = vpack.c.b16 %v356, %v355
    %v383 = vpack.c.b16 %v358, %v357
    %v384 = vpack.c.b16 %v360, %v359
    %409 = vmatprep.subr.bf16.mxu0 0
    %410 = vmatpush1.bf16.msra.mxu0 %v361
    %411 = vmatprep.subr.bf16.mxu0 0
    %412 = vmatpush1.bf16.msra.mxu0 %v362
    %413 = vmatprep.subr.bf16.mxu0 0
    %414 = vmatpush1.bf16.msra.mxu0 %v363
    %415 = vmatprep.subr.bf16.mxu0 0
    %416 = vmatpush1.bf16.msra.mxu0 %v364
    %417 = vmatprep.subr.bf16.mxu0 0
    %418 = vmatpush1.bf16.msra.mxu0 %v365
    %419 = vmatprep.subr.bf16.mxu0 0
    %420 = vmatpush1.bf16.msra.mxu0 %v366
    %421 = vmatprep.subr.bf16.mxu0 0
    %422 = vmatpush1.bf16.msra.mxu0 %v367
    %423 = vmatprep.subr.bf16.mxu0 0
    %424 = vmatpush1.bf16.msra.mxu0 %v368
    %425 = vmatprep.subr.bf16.mxu0 0
    %426 = vmatpush1.bf16.msra.mxu0 %v369
    %427 = vmatprep.subr.bf16.mxu0 0
    %428 = vmatpush1.bf16.msra.mxu0 %v370
    %429 = vmatprep.subr.bf16.mxu0 0
    %430 = vmatpush1.bf16.msra.mxu0 %v371
    %431 = vmatprep.subr.bf16.mxu0 0
    %432 = vmatpush1.bf16.msra.mxu0 %v372
    %433 = vmatprep.subr.bf16.mxu0 0
    %434 = vmatpush1.bf16.msra.mxu0 %v373
    %435 = vmatprep.subr.bf16.mxu0 0
    %436 = vmatpush1.bf16.msra.mxu0 %v374
    %437 = vmatprep.subr.bf16.mxu0 0
    %438 = vmatpush1.bf16.msra.mxu0 %v375
    %439 = vmatprep.subr.bf16.mxu0 0
    %440 = vmatpush1.bf16.msra.mxu0 %v376
    %441 = vmatprep.mubr.bf16.mxu0 %v214
    %442 = vmatmul.mubr.bf16.gmra.mrb[0].mxu0 %v213
    %v443 = vpop.f32.mrb[0].mxu0
    %v444 = vadd.f32 %v264, %v443
    %v445 = vpop.f32.mrb[0].mxu0
    %v446 = vpop.f32.mrb[0].mxu0
    %v447 = vpop.f32.mrb[0].mxu0
    %448 = vdwg.mxu0
    %449 = vmatprep.subr.bf16.mxu0 0
    %450 = vmatpush1.bf16.msra.mxu0 %v377
    %451 = vmatprep.subr.bf16.mxu0 0
    %452 = vmatpush1.bf16.msra.mxu0 %v378
    %453 = vmatprep.subr.bf16.mxu0 0
    %454 = vmatpush1.bf16.msra.mxu0 %v379
    %455 = vmatprep.subr.bf16.mxu0 0
    %456 = vmatpush1.bf16.msra.mxu0 %v380
    %457 = vmatprep.subr.bf16.mxu0 0
    %458 = vmatpush1.bf16.msra.mxu0 %v381
    %459 = vmatprep.subr.bf16.mxu0 0
    %460 = vmatpush1.bf16.msra.mxu0 %v382
    %461 = vmatprep.subr.bf16.mxu0 0
    %462 = vmatpush1.bf16.msra.mxu0 %v383
    %463 = vmatprep.subr.bf16.mxu0 0
    %464 = vmatpush1.bf16.msra.mxu0 %v384
    %465 = vmatprep.subr.bf16.mxu0 0
    %466 = vmatpush1.bf16.msra.mxu0 0
    %467 = vmatprep.subr.bf16.mxu0 0
    %468 = vmatpush1.bf16.msra.mxu0 0
    %469 = vmatprep.subr.bf16.mxu0 0
    %470 = vmatpush1.bf16.msra.mxu0 0
    %471 = vmatprep.subr.bf16.mxu0 0
    %472 = vmatpush1.bf16.msra.mxu0 0
    %473 = vmatprep.subr.bf16.mxu0 0
    %474 = vmatpush1.bf16.msra.mxu0 0
    %475 = vmatprep.subr.bf16.mxu0 0
    %476 = vmatpush1.bf16.msra.mxu0 0
    %477 = vmatprep.subr.bf16.mxu0 0
    %478 = vmatpush1.bf16.msra.mxu0 0
    %479 = vmatprep.subr.bf16.mxu0 0
    %480 = vmatpush1.bf16.msra.mxu0 0
    %481 = vmatprep.mubr.bf16.mxu0 0
    %482 = vmatmul.mubr.bf16.gmra.mrb[0].mxu0 %v215
    %v483 = vpop.f32.mrb[0].mxu0
    %v484 = vadd.f32 %v444, %v483
    %v485 = vpop.f32.mrb[0].mxu0
    %v486 = vpop.f32.mrb[0].mxu0
    %v487 = vpop.f32.mrb[0].mxu0
    %488 = vdwg.mxu0
    %v489 = vtanh.pop %v484
    %v490 = vpack.c.bf16 %v489, %v489
    %v491 = vld [vmem:[#allocation8] sm:$0xf]
    %v492 = vld [vmem:[#allocation8 + $0x4] sm:$0xf]
    %v493 = vld [vmem:[#allocation8 + $0x8] sm:$0xf]
    %v494 = vld [vmem:[#allocation8 + $0xc] sm:$0xf]
    %v495 = vld [vmem:[#allocation8 + $0x10] sm:$0xf]
    %v496 = vld [vmem:[#allocation8 + $0x14] sm:$0xf]
    %v497 = vld [vmem:[#allocation8 + $0x18] sm:$0xf]
    %v498 = vld [vmem:[#allocation8 + $0x1c] sm:$0xf]
    %v499 = vld [vmem:[#allocation8 + $0x20] sm:$0xf]
    %v500 = vld [vmem:[#allocation8 + $0x24] sm:$0xf]
    %v501 = vld [vmem:[#allocation8 + $0x28] sm:$0xf]
    %v502 = vld [vmem:[#allocation8 + $0x2c] sm:$0xf]
    %v503 = vld [vmem:[#allocation8 + $0x30] sm:$0xf]
    %v504 = vld [vmem:[#allocation8 + $0x34] sm:$0xf]
    %v505 = vld [vmem:[#allocation8 + $0x38] sm:$0xf]
    %v506 = vld [vmem:[#allocation8 + $0x3c] sm:$0xf]
    %v507 = vld [vmem:[#allocation10 + $0x2] ss:$0 sm:$0xff]
    %v524 = vunpack.c.l.b16 %v491
    %v525 = vunpack.c.l.b16 %v492
    %v526 = vunpack.c.l.b16 %v493
    %v527 = vunpack.c.l.b16 %v494
    %v528 = vunpack.c.l.b16 %v495
    %v529 = vunpack.c.l.b16 %v496
    %v530 = vunpack.c.l.b16 %v497
    %v531 = vunpack.c.l.b16 %v498
    %v532 = vunpack.c.l.b16 %v499
    %v533 = vunpack.c.l.b16 %v500
    %v534 = vunpack.c.l.b16 %v501
    %v535 = vunpack.c.l.b16 %v502
    %v536 = vunpack.c.l.b16 %v503
    %v537 = vunpack.c.l.b16 %v504
    %v538 = vunpack.c.l.b16 %v505
    %v539 = vunpack.c.l.b16 %v506
    %v540 = vpack.c.b16 %v525, %v524
    %v541 = vpack.c.b16 %v527, %v526
    %v542 = vpack.c.b16 %v529, %v528
    %v543 = vpack.c.b16 %v531, %v530
    %v544 = vpack.c.b16 %v533, %v532
    %v545 = vpack.c.b16 %v535, %v534
    %v546 = vpack.c.b16 %v537, %v536
    %v547 = vpack.c.b16 %v539, %v538
    %556 = vmatprep.subr.bf16.mxu0 0
    %557 = vmatpush1.bf16.msra.mxu0 %v540
    %558 = vmatprep.subr.bf16.mxu0 0
    %559 = vmatpush1.bf16.msra.mxu0 %v541
    %560 = vmatprep.subr.bf16.mxu0 0
    %561 = vmatpush1.bf16.msra.mxu0 %v542
    %562 = vmatprep.subr.bf16.mxu0 0
    %563 = vmatpush1.bf16.msra.mxu0 %v543
    %564 = vmatprep.subr.bf16.mxu0 0
    %565 = vmatpush1.bf16.msra.mxu0 %v544
    %566 = vmatprep.subr.bf16.mxu0 0
    %567 = vmatpush1.bf16.msra.mxu0 %v545
    %568 = vmatprep.subr.bf16.mxu0 0
    %569 = vmatpush1.bf16.msra.mxu0 %v546
    %570 = vmatprep.subr.bf16.mxu0 0
    %571 = vmatpush1.bf16.msra.mxu0 %v547
    %572 = vmatprep.subr.bf16.mxu0 0
    %573 = vmatpush1.bf16.msra.mxu0 0
    %574 = vmatprep.subr.bf16.mxu0 0
    %575 = vmatpush1.bf16.msra.mxu0 0
    %576 = vmatprep.subr.bf16.mxu0 0
    %577 = vmatpush1.bf16.msra.mxu0 0
    %578 = vmatprep.subr.bf16.mxu0 0
    %579 = vmatpush1.bf16.msra.mxu0 0
    %580 = vmatprep.subr.bf16.mxu0 0
    %581 = vmatpush1.bf16.msra.mxu0 0
    %582 = vmatprep.subr.bf16.mxu0 0
    %583 = vmatpush1.bf16.msra.mxu0 0
    %584 = vmatprep.subr.bf16.mxu0 0
    %585 = vmatpush1.bf16.msra.mxu0 0
    %586 = vmatprep.subr.bf16.mxu0 0
    %587 = vmatpush1.bf16.msra.mxu0 0
    %588 = vmatprep.mubr.bf16.mxu0 0
    %589 = vmatmul.mubr.bf16.gmra.mrb[0].mxu0 %v490
    %v590 = vpop.f32.mrb[0].mxu0
    %v591 = vadd.f32 %v507, %v590
    %v592 = vpop.f32.mrb[0].mxu0
    %v593 = vpop.f32.mrb[0].mxu0
    %v594 = vpop.f32.mrb[0].mxu0
    %595 = vdwg.mxu0
    %v596 = vlaneseq
    %v597 = vand.u32 %v596, 127
    %vm598 = vcmp.lt.s32.totalorder %v597, 64
    %v599 = vtanh.pop %v591
    %v600 = vmul.f32 %v599, 2.0
    %v601 = vsel %vm598, %v600, %v591
    %602 = vst [vmem:[#allocation11] sm:$0xff] %v601
    // Predicated region
    $region42: #{tpu_custom_call.1} parent=1 // pred_check
      _
    $region43: #{tpu_custom_call.1} parent=1 // pred_check_branch
      %604 = sbr.rel (0) target = $region45
    $region44: #{tpu_custom_call.1} parent=1 // pred_region
      %s606 = ssub.s32 128, 128
      %607 = vsyncadd [#allocation4], %s606
      %s609 = sshll.u32 [#allocation11], 4
      %s610 = int_to_ptr.vmem [resolvable:$true] %s609
      %612 = dma.vmem_to_hbm [thread:$0]  %s610, 128, %s5, [#allocation4]
    $region45: #{tpu_custom_call.1} parent=1 // pred_fallthru
      _
    // Predicated region
    $region46: #{tpu_custom_call.1} parent=1 // pred_check
      _
    $region47: #{tpu_custom_call.1} parent=1 // pred_check_branch
      %614 = sbr.rel (0) target = $region49
    $region48: #{tpu_custom_call.1} parent=1 // pred_region
      %615 = dma.done [#allocation4], 128
    $region49: #{tpu_custom_call.1} parent=1 // pred_fallthru
      _
    %616 = vsyncpa [#allocation3], 1
    %617 = vsyncpa [#allocation6], 1
    %618 = vsyncpa [#allocation9], 1
    %619 = vsyncpa [#allocation4], 1

</llo_original>
